<compile_context>
chip_gen: v5e
topology: v5e:2x2
jax: 0.10.0
libtpu: 0.0.40
codegen_flags: <defaults>
</compile_context>

<pallas_src>
import functools
import numpy as np
import jax
import jax.numpy as jnp
from jax import lax
from jax.experimental import pallas as pl
from jax.experimental.pallas import tpu as pltpu


_TILE_Q = 256                     # stage-2 row tile (feeds the 256x256 MXU)
_TILE_K = 256                     # stage-2 col (reduction) tile
_LANE = 128                       # lane width for padded feature dimension
_ELANE = 128                      # lane-padded width of the e-logit output
_STATS_LANE = 128                 # lane-padded width of the m/l scratch
_VMEM_LIMIT = 32 * 1024 * 1024    # explicit scoped-VMEM budget (fits v5e/v6e/v7x)


def _round_up(v, m):
    return (v + m - 1) // m * m


# ---------------------------------------------------------------------------
# Pallas kernels
# ---------------------------------------------------------------------------

def _gat_proj_kernel(x_ref, w_ref, a_ref, h_ref, e_ref):
    """All heads: h = x @ Wcat (lane padded, stored bf16),
    e = h @ Acat = [e_src | e_dst | 0-pad] (128-lane padded, f32)."""
    h = jnp.dot(x_ref[...], w_ref[...], preferred_element_type=jnp.float32)
    h_ref[...] = h.astype(h_ref.dtype)                 # bf16 lane-dense store
    e_ref[...] = jnp.dot(h, a_ref[...], preferred_element_type=jnp.float32)


def _gat_attn_kernel(e_row_ref, e_colT_ref, h_ref, adj_ref, o_ref,
                     stats_ref, acc_ref,
                     *, heads, fp, fpad, tq, tk, alpha, apply_elu):
    """Fused multi-head, adjacency-masked online-softmax attention.

    grid = (row_tiles, col_tiles); col axis is the (arbitrary) reduction axis.
    stats_ref lanes [0:heads] hold the running max m, lanes [heads:2*heads]
    the running denominator l (128-lane padded -> full-width stores).
    """
    c = pl.program_id(1)
    n_c = pl.num_programs(1)

    @pl.when(c == 0)
    def _init():
        lane = lax.broadcasted_iota(jnp.int32, (tq, _STATS_LANE), 1)
        stats_ref[...] = jnp.where(lane < heads,
                                   jnp.float32(-1e30), jnp.float32(0.0))
        acc_ref[...] = jnp.zeros_like(acc_ref)

    adjf = adj_ref[...].astype(jnp.float32)            # (tq, tk) 0/1 mask
    bias = (adjf - 1.0) * jnp.float32(1e30)            # 0 on edges, -1e30 off

    pad = fpad - heads * fp
    m_cols, l_cols, corr_cols, upd_cols = [], [], [], []
    for head in range(heads):
        off = head * fp
        e_src = e_row_ref[:, head:head + 1]            # (tq, 1)
        e_dst = e_colT_ref[head:head + 1, :]           # (1, tk)  pre-transposed

        # rank-1 outer sum score[i, j] = e_src[i] + e_dst[j]: pure VPU
        # broadcast-add (no MXU pass, no lane-sparse concats).
        score = e_src + e_dst                                       # (tq, tk)
        score = jnp.maximum(score, alpha * score) + bias  # LeakyReLU + mask

        m_prev = stats_ref[:, head:head + 1]
        l_prev = stats_ref[:, heads + head:heads + head + 1]
        m_new = jnp.maximum(m_prev, jnp.max(score, axis=1, keepdims=True))
        corr = jnp.exp(m_prev - m_new)
        # score - m_new <= 0 always, so exp never overflows; the `* adjf`
        # multiply keeps off-edge probabilities exactly zero (rows with no
        # edge stay all-zero) -- do not remove it.
        p = jnp.exp(score - m_new) * adjf
        l_new = corr * l_prev + jnp.sum(p, axis=1, keepdims=True)

        # attn @ h : bf16 MXU inputs (h already bf16), f32 accumulation.
        pv = jnp.dot(p.astype(jnp.bfloat16), h_ref[:, off:off + fp],
                     preferred_element_type=jnp.float32)            # (tq, fp)

        m_cols.append(m_new)
        l_cols.append(l_new)
        corr_cols.append(jnp.broadcast_to(corr, (tq, fp)))
        upd_cols.append(pv)

    # single full-width (128-lane) stats store per col tile
    stats_ref[...] = jnp.concatenate(
        m_cols + l_cols
        + [jnp.zeros((tq, _STATS_LANE - 2 * heads), jnp.float32)], axis=1)

    if pad:
        corr_cols.append(jnp.ones((tq, pad), jnp.float32))
        upd_cols.append(jnp.zeros((tq, pad), jnp.float32))
    # single full-width (lane-dense) accumulator update
    acc_ref[...] = (acc_ref[...] * jnp.concatenate(corr_cols, axis=1)
                    + jnp.concatenate(upd_cols, axis=1))

    @pl.when(c == n_c - 1)
    def _finalize():
        inv = pl.reciprocal(stats_ref[:, heads:2 * heads] + 1e-16, approx=True)
        cols = [jnp.broadcast_to(inv[:, head:head + 1], (tq, fp))
                for head in range(heads)]
        if pad:
            cols.append(jnp.zeros((tq, pad), jnp.float32))
        out = acc_ref[...] * jnp.concatenate(cols, axis=1)
        if apply_elu:
            # fused ELU for the norm_mode == 'None' fast path
            out = jnp.where(out > 0, out, jnp.exp(jnp.minimum(out, 0.0)) - 1.0)
        # one unmasked 128-lane-wide store
        o_ref[...] = out.astype(o_ref.dtype)


def _pairnorm_elu_kernel(x_ref, stats_ref, o_ref, *, mode, scale):
    """Row-tiled PairNormLayer normalize + ELU.

    stats_ref row 0 = column mean; row 1 = scale / rownorm_mean broadcast
    (used only in 'PN' mode).  The cross-row statistics are computed with
    plain XLA in the wrapper, so this kernel tiles over rows and scales past
    v7x's 64 MiB VMEM.
    """
    x = x_ref[...]
    if mode == 'None':
        y = x
    elif mode == 'PN':
        y = (x - stats_ref[0:1, :]) * stats_ref[1:2, :]
    elif mode == 'PN-SI':
        xc = x - stats_ref[0:1, :]
        rn = jnp.sqrt(1e-6 + jnp.sum(xc * xc, axis=1, keepdims=True))
        y = scale * xc / rn
    else:  # 'PN-SCS'
        rn = jnp.sqrt(1e-6 + jnp.sum(x * x, axis=1, keepdims=True))
        y = scale * x / rn - stats_ref[0:1, :]
    # ELU(alpha=1); min() keeps exp from generating inf on the discarded lanes.
    o_ref[...] = jnp.where(y > 0, y, jnp.exp(jnp.minimum(y, 0.0)) - 1.0)


# ---------------------------------------------------------------------------
# Wrappers
# ---------------------------------------------------------------------------

def _pack_heads(layer):
    """Pack per-head (W, a) into Wcat (Fin, Fpad) and Acat (Fpad, _ELANE).

    Fpad is heads*Fout rounded up to a lane multiple (zero padded) so every
    kernel store is lane-dense; Acat maps packed h to [e_src | e_dst | 0-pad].
    """
    heads = len(layer)
    fin, fp = layer[0][0].shape
    assert 2 * heads <= _ELANE and 2 * heads <= _STATS_LANE
    fpad = _round_up(max(heads * fp, _LANE), _LANE)
    w_cat = jnp.zeros((fin, fpad), jnp.float32)
    a_cat = jnp.zeros((fpad, _ELANE), jnp.float32)
    for h, (w, a) in enumerate(layer):
        w_cat = w_cat.at[:, h * fp:(h + 1) * fp].set(w)
        a_cat = a_cat.at[h * fp:(h + 1) * fp, h].set(a[0, :fp])
        a_cat = a_cat.at[h * fp:(h + 1) * fp, heads + h].set(a[0, fp:])
    return w_cat, a_cat


def gat_layer(x, w_cat, a_cat, adj_i8, *, heads, fp, alpha=0.2,
              tile_q=_TILE_Q, tile_k=_TILE_K, apply_elu=False):
    """One full GraphAttConv layer (all heads fused, concatenated output)."""
    n, fin = x.shape
    fpad = w_cat.shape[1]
    n_pad = adj_i8.shape[0]
    assert n_pad % tile_q == 0 and n_pad % tile_k == 0
    if n_pad != n:
        x = jnp.pad(x, ((0, n_pad - n), (0, 0)))
    r = n_pad // tile_q
    c = n_pad // tile_k

    # ---- stage 1: per-head projection h = x W (bf16) and logits e (f32) ----
    h_pad, e = pl.pallas_call(
        _gat_proj_kernel,
        out_shape=(jax.ShapeDtypeStruct((n_pad, fpad), jnp.bfloat16),
                   jax.ShapeDtypeStruct((n_pad, _ELANE), jnp.float32)),
        grid_spec=pltpu.PrefetchScalarGridSpec(
            num_scalar_prefetch=0, grid=(r,),
            in_specs=[pl.BlockSpec((tile_q, fin), lambda i: (i, 0)),
                      pl.BlockSpec((fin, fpad), lambda i: (0, 0)),
                      pl.BlockSpec((fpad, _ELANE), lambda i: (0, 0))],
            out_specs=[pl.BlockSpec((tile_q, fpad), lambda i: (i, 0)),
                       pl.BlockSpec((tile_q, _ELANE), lambda i: (i, 0))]),
        compiler_params=pltpu.CompilerParams(
            dimension_semantics=("parallel",),
            vmem_limit_bytes=_VMEM_LIMIT),
        cost_estimate=pl.CostEstimate(
            flops=2 * n_pad * fin * fpad + 2 * n_pad * fpad * _ELANE,
            transcendentals=0,
            bytes_accessed=(4 * n_pad * fin + 4 * fin * fpad
                            + 4 * fpad * _ELANE
                            + 2 * n_pad * fpad           # bf16 h store
                            + 4 * n_pad * _ELANE)),
    )(x, w_cat, a_cat)

    # one-time wrapper transpose of the e_dst logits -> (8, N) so the kernel's
    # rank-1 score is a pure VPU broadcast-add (no in-kernel relayouts).
    hsub = max(8, _round_up(heads, 8))
    e_colT = jnp.zeros((hsub, n_pad), jnp.float32).at[:heads, :].set(
        jnp.transpose(e[:, heads:2 * heads]))

    # ---- stage 2: fused multi-head masked online-softmax attention --------
    kern = functools.partial(_gat_attn_kernel, heads=heads, fp=fp, fpad=fpad,
                             tq=tile_q, tk=tile_k, alpha=alpha,
                             apply_elu=apply_elu)
    out_pad = pl.pallas_call(
        kern,
        out_shape=jax.ShapeDtypeStruct((n_pad, fpad), jnp.float32),
        grid_spec=pltpu.PrefetchScalarGridSpec(
            num_scalar_prefetch=0, grid=(r, c),
            in_specs=[pl.BlockSpec((tile_q, _ELANE), lambda i, j: (i, 0)),
                      pl.BlockSpec((hsub, tile_k), lambda i, j: (0, j)),
                      pl.BlockSpec((tile_k, fpad), lambda i, j: (j, 0)),
                      pl.BlockSpec((tile_q, tile_k), lambda i, j: (i, j))],
            out_specs=pl.BlockSpec((tile_q, fpad), lambda i, j: (i, 0)),
            scratch_shapes=[
                pltpu.VMEM((tile_q, _STATS_LANE), jnp.float32),  # m | l stats
                pltpu.VMEM((tile_q, fpad), jnp.float32)]),       # accumulator
        compiler_params=pltpu.CompilerParams(
            # On v7x the row axis could be pltpu.CORE_PARALLEL for explicit
            # dual-TC sharding; "parallel" kept for portability.
            dimension_semantics=("parallel", "arbitrary"),
            vmem_limit_bytes=_VMEM_LIMIT),
        cost_estimate=pl.CostEstimate(
            flops=heads * n_pad * n_pad * (2 * fp + 5),
            transcendentals=heads * n_pad * n_pad,
            bytes_accessed=(n_pad * n_pad                 # int8 adjacency
                            + r * n_pad * fpad * 2        # bf16 h, re-read / row tile
                            + r * hsub * n_pad * 4        # e_colT, re-read / row tile
                            + n_pad * _ELANE * 4          # e_row
                            + n_pad * fpad * 4)),         # output
    )(e, e_colT, h_pad, adj_i8)

    return out_pad[:n, :heads * fp]


def pairnorm_elu(x, mode='None', scale=1.0, tile=_TILE_Q):
    """PairNormLayer followed by ELU, row-tiled.

    Cross-row statistics (column mean, mean centered row norm) are computed
    with plain XLA reductions; the normalize + ELU runs as a tiled Pallas
    kernel so nothing requires whole-array VMEM residency.
    """
    n, f = x.shape
    if mode == 'None':
        stats = jnp.zeros((2, f), jnp.float32)
    else:
        col_mean = jnp.mean(x, axis=0, keepdims=True)
        if mode == 'PN':
            xc = x - col_mean
            rownorm_mean = jnp.sqrt(1e-6 + jnp.mean(jnp.sum(xc * xc, axis=1)))
            row1 = jnp.zeros_like(col_mean) + (scale / rownorm_mean)
        else:
            row1 = jnp.zeros_like(col_mean)
        stats = jnp.concatenate([col_mean, row1], axis=0)

    n_pad = _round_up(n, tile)
    x_pad = jnp.pad(x, ((0, n_pad - n), (0, 0))) if n_pad != n else x
    kernel = functools.partial(_pairnorm_elu_kernel, mode=mode,
                               scale=float(scale))
    out = pl.pallas_call(
        kernel,
        out_shape=jax.ShapeDtypeStruct((n_pad, f), jnp.float32),
        grid_spec=pltpu.PrefetchScalarGridSpec(
            num_scalar_prefetch=0, grid=(n_pad // tile,),
            in_specs=[pl.BlockSpec((tile, f), lambda i: (i, 0)),
                      pl.BlockSpec((2, f), lambda i: (0, 0))],
            out_specs=pl.BlockSpec((tile, f), lambda i: (i, 0))),
        compiler_params=pltpu.CompilerParams(
            dimension_semantics=("parallel",),
            vmem_limit_bytes=_VMEM_LIMIT),
        cost_estimate=pl.CostEstimate(
            flops=8 * n_pad * f, transcendentals=n_pad * f,
            bytes_accessed=8 * n_pad * f + 8 * f),
    )(x_pad, stats)
    return out[:n]


# ---------------------------------------------------------------------------
# Parameter init (matches nn.init.xavier_normal_ with gain('relu') = sqrt(2))
# ---------------------------------------------------------------------------

def _xavier_normal(key, shape, gain):
    fan_in, fan_out = shape[0], shape[1]
    std = gain * np.sqrt(2.0 / (fan_in + fan_out))
    return std * jax.random.normal(key, shape, dtype=jnp.float32)


def init_gat_conv(key, in_features, out_features, heads):
    """GraphAttConv: `heads` single-head layers: W (in, out//heads), a (1, 2*out//heads)."""
    out_perhead = out_features // heads
    gain = np.sqrt(2.0)
    params = []
    for _ in range(heads):
        key, kw, ka = jax.random.split(key, 3)
        w = _xavier_normal(kw, (in_features, out_perhead), gain)
        a = _xavier_normal(ka, (1, 2 * out_perhead), gain)
        params.append((w, a))
    return key, params


def init_deep_gat(key, nfeat, nhid, nclass, nlayer=2, nhead=1):
    hidden = []
    for i in range(nlayer - 1):
        key, layer = init_gat_conv(key, nfeat if i == 0 else nhid, nhid, nhead)
        hidden.append(layer)
    key, out_layer = init_gat_conv(key, nfeat if nlayer == 1 else nhid, nclass, 1)
    return {'hidden': hidden, 'out': out_layer}


# ---------------------------------------------------------------------------
# DeepGAT forward
# ---------------------------------------------------------------------------

def deep_gat_forward(params, x, adj, *, norm_mode='None', norm_scale=1.0, skip=0):
    n = x.shape[0]
    n_pad = _round_up(n, max(_TILE_Q, _TILE_K))
    # int8 adjacency mask, padded once and reused by every layer / head.
    adj_i8 = (adj != 0).astype(jnp.int8)
    if n_pad != n:
        adj_i8 = jnp.pad(adj_i8, ((0, n_pad - n), (0, n_pad - n)))

    fuse_elu = (norm_mode == 'None')      # skip PairNorm, ELU fused in attn
    x_old = 0.0
    for i, layer in enumerate(params['hidden']):
        # dropout -> identity (eval mode)
        heads = len(layer)
        fp = layer[0][0].shape[1]
        w_cat, a_cat = _pack_heads(layer)
        x = gat_layer(x, w_cat, a_cat, adj_i8, heads=heads, fp=fp,
                      apply_elu=fuse_elu)
        if not fuse_elu:
            x = pairnorm_elu(x, mode=norm_mode, scale=norm_scale)  # norm + ELU
        if skip > 0 and i % skip == 0:
            x = x + x_old
            x_old = x
    # dropout -> identity (eval mode)
    heads = len(params['out'])
    fp = params['out'][0][0].shape[1]
    w_cat, a_cat = _pack_heads(params['out'])
    return gat_layer(x, w_cat, a_cat, adj_i8, heads=heads, fp=fp)


# ---------------------------------------------------------------------------
# Pure-JAX f32 reference (for sanity check)
# ---------------------------------------------------------------------------

def _ref_gat_head(x, w, a, adj, alpha=0.2):
    h = x @ w
    fout = w.shape[1]
    e_src = h @ a[:, :fout].T          # (N, 1)
    e_dst = h @ a[:, fout:].T          # (N, 1)
    score = e_src + e_dst.T
    leaky = jnp.where(score > 0, score, alpha * score)
    mask = adj != 0
    row_max = jnp.max(jnp.where(mask, leaky, -1e30), axis=1, keepdims=True)
    p = jnp.where(mask, jnp.exp(jnp.minimum(leaky - row_max, 0.0)), 0.0)
    attn = p / (jnp.sum(p, axis=1, keepdims=True) + 1e-16)
    return attn @ h


def _ref_pairnorm_elu(x, mode, scale):
    if mode != 'None':
        col_mean = jnp.mean(x, axis=0, keepdims=True)
        if mode == 'PN':
            x = x - col_mean
            x = scale * x / jnp.sqrt(1e-6 + jnp.mean(jnp.sum(x * x, axis=1)))
        elif mode == 'PN-SI':
            x = x - col_mean
            x = scale * x / jnp.sqrt(1e-6 + jnp.sum(x * x, axis=1, keepdims=True))
        else:
            x = scale * x / jnp.sqrt(1e-6 + jnp.sum(x * x, axis=1, keepdims=True)) - col_mean
    return jnp.where(x > 0, x, jnp.exp(x) - 1.0)


def _ref_forward(params, x, adj, *, norm_mode, norm_scale, skip):
    x_old = 0.0
    for i, layer in enumerate(params['hidden']):
        x = jnp.concatenate([_ref_gat_head(x, w, a, adj) for (w, a) in layer], axis=1)
        x = _ref_pairnorm_elu(x, norm_mode, norm_scale)
        if skip > 0 and i % skip == 0:
            x = x + x_old
            x_old = x
    (w, a) = params['out'][0]
    return _ref_gat_head(x, w, a, adj)


# ---------------------------------------------------------------------------
# main
# ---------------------------------------------------------------------------

if __name__ == "__main__":
    N, NFEAT, NHID, NCLASS = 256, 32, 16, 4
    NLAYER, NHEAD = 2, 2

    key = jax.random.PRNGKey(0)
    key, kx, kadj = jax.random.split(key, 3)

    x = jax.random.normal(kx, (N, NFEAT), dtype=jnp.float32)
    # random sparse-ish adjacency with self loops (dense float representation)
    adj = (jax.random.uniform(kadj, (N, N)) < 0.3).astype(jnp.float32)
    adj = jnp.maximum(adj, jnp.eye(N, dtype=jnp.float32))

    params = init_deep_gat(key, NFEAT, NHID, NCLASS, nlayer=NLAYER, nhead=NHEAD)

    # --- PairNorm ('PN') path: tiled PairNorm+ELU Pallas kernel ------------
    out = deep_gat_forward(params, x, adj,
                           norm_mode='PN', norm_scale=1.0, skip=0)
    out = jax.block_until_ready(out)
    ref = _ref_forward(params, x, adj, norm_mode='PN', norm_scale=1.0, skip=0)
    # Kernel deviates from the pure-f32 reference only through the bf16
    # attn @ h matmul (f32 accumulation) and the EUP approx reciprocal.
    np.testing.assert_allclose(np.asarray(out), np.asarray(ref),
                               rtol=3e-2, atol=3e-2)
    assert out.shape == (N, NCLASS)

    # --- norm_mode='None' path: fused ELU in the attention finalize --------
    out2 = deep_gat_forward(params, x, adj,
                            norm_mode='None', norm_scale=1.0, skip=1)
    out2 = jax.block_until_ready(out2)
    ref2 = _ref_forward(params, x, adj, norm_mode='None', norm_scale=1.0, skip=1)
    np.testing.assert_allclose(np.asarray(out2), np.asarray(ref2),
                               rtol=3e-2, atol=3e-2)

    print("KERNEL_OK")
</pallas_src>

<mosaic_0001>
module attributes {stable_mosaic.version = 11 : i64} {
  func.func @_gat_proj_kernel(%arg0: i32, %arg1: memref<256x32xf32, #tpu.memory_space<vmem>>, %arg2: memref<32x128xf32, #tpu.memory_space<vmem>>, %arg3: memref<128x128xf32, #tpu.memory_space<vmem>>, %arg4: memref<256x128xbf16, #tpu.memory_space<vmem>>, %arg5: memref<256x128xf32, #tpu.memory_space<vmem>>) attributes {dimension_semantics = [#tpu.dimension_semantics<parallel>], iteration_bounds = array<i64: 1>, scalar_prefetch = 0 : i64, scratch_operands = 0 : i64, tpu.core_type = #tpu.core_type<tc>, window_params = [{transform_indices = @transform_0, window_bounds = array<i64: 256, 32>}, {pipeline_mode = #tpu.pipeline_mode<synchronous>, transform_indices = @transform_1, window_bounds = array<i64: 32, 128>}, {pipeline_mode = #tpu.pipeline_mode<synchronous>, transform_indices = @transform_2, window_bounds = array<i64: 128, 128>}, {transform_indices = @transform_3, window_bounds = array<i64: 256, 128>}, {transform_indices = @transform_4, window_bounds = array<i64: 256, 128>}]} {
    %c0 = arith.constant 0 : index
    %c0_0 = arith.constant 0 : index
    %0 = vector.load %arg1[%c0, %c0_0] : memref<256x32xf32, #tpu.memory_space<vmem>>, vector<256x32xf32>
    %c0_1 = arith.constant 0 : index
    %c0_2 = arith.constant 0 : index
    %1 = vector.load %arg2[%c0_1, %c0_2] : memref<32x128xf32, #tpu.memory_space<vmem>>, vector<32x128xf32>
    %cst = arith.constant dense<0.000000e+00> : vector<256x128xf32>
    %2 = tpu.matmul %0, %1, %cst {dimension_numbers = #tpu.dot_dimension_numbers<[1], [0], [0], [1], [0, 0, 1, 1], [], []>} : vector<256x32xf32>, vector<32x128xf32>, vector<256x128xf32> -> vector<256x128xf32>
    %3 = arith.truncf %2 : vector<256x128xf32> to vector<256x128xbf16>
    %c0_3 = arith.constant 0 : index
    %c0_4 = arith.constant 0 : index
    %4 = vector.load %arg4[%c0_3, %c0_4] : memref<256x128xbf16, #tpu.memory_space<vmem>>, vector<256x128xbf16>
    tpu.vector_store %arg4[%c0_3, %c0_4], %3 {strides = array<i32>} : memref<256x128xbf16, #tpu.memory_space<vmem>>, vector<256x128xbf16>,
    %c0_5 = arith.constant 0 : index
    %c0_6 = arith.constant 0 : index
    %5 = vector.load %arg3[%c0_5, %c0_6] : memref<128x128xf32, #tpu.memory_space<vmem>>, vector<128x128xf32>
    %cst_7 = arith.constant dense<0.000000e+00> : vector<256x128xf32>
    %6 = tpu.matmul %2, %5, %cst_7 {dimension_numbers = #tpu.dot_dimension_numbers<[1], [0], [0], [1], [0, 0, 1, 1], [], []>} : vector<256x128xf32>, vector<128x128xf32>, vector<256x128xf32> -> vector<256x128xf32>
    %c0_8 = arith.constant 0 : index
    %c0_9 = arith.constant 0 : index
    %7 = vector.load %arg5[%c0_8, %c0_9] : memref<256x128xf32, #tpu.memory_space<vmem>>, vector<256x128xf32>
    tpu.vector_store %arg5[%c0_8, %c0_9], %6 {strides = array<i32>} : memref<256x128xf32, #tpu.memory_space<vmem>>, vector<256x128xf32>,
    return
  }
  func.func @transform_0(%arg0: i32) -> (i32, i32) {
    %c0_i32 = arith.constant 0 : i32
    %c0_i32_0 = arith.constant 0 : i32
    return %arg0, %c0_i32 : i32, i32
  }
  func.func @transform_1(%arg0: i32) -> (i32, i32) {
    %c0_i32 = arith.constant 0 : i32
    %c0_i32_0 = arith.constant 0 : i32
    %c0_i32_1 = arith.constant 0 : i32
    return %c0_i32, %c0_i32_0 : i32, i32
  }
  func.func @transform_2(%arg0: i32) -> (i32, i32) {
    %c0_i32 = arith.constant 0 : i32
    %c0_i32_0 = arith.constant 0 : i32
    %c0_i32_1 = arith.constant 0 : i32
    return %c0_i32, %c0_i32_0 : i32, i32
  }
  func.func @transform_3(%arg0: i32) -> (i32, i32) {
    %c0_i32 = arith.constant 0 : i32
    %c0_i32_0 = arith.constant 0 : i32
    return %arg0, %c0_i32 : i32, i32
  }
  func.func @transform_4(%arg0: i32) -> (i32, i32) {
    %c0_i32 = arith.constant 0 : i32
    %c0_i32_0 = arith.constant 0 : i32
    return %arg0, %c0_i32 : i32, i32
  }
}

</mosaic_0001>

<llo_original>
// kernel: tpu_custom_call.1
$region0: #{tpu_custom_call.1}
  #allocation0 [shape = 'u32[]', space=smem, size = 0x4, offset = 0x4, fixed_abs, tag = 'smem constant byte address 0x4 - core index']
  #allocation1 [shape = 'u32[72,128]{1,0:T(1,128)}', space=vmem, size = 0x9000, scoped, tag = 'internal scratch']
  %s0 = inlined_call_operand.vmem [shape: f32[256,32], index: 0, kind: input, shape index: {}]
  %s1 = inlined_call_operand.vmem [shape: f32[32,128], index: 1, kind: input, shape index: {}]
  %s2 = inlined_call_operand.vmem [shape: f32[128,128], index: 2, kind: input, shape index: {}]
  %s3 = inlined_call_operand.hbm [shape: bf16[256,128], index: 3, kind: output, shape index: {0}]
  %s4 = inlined_call_operand.hbm [shape: f32[256,128], index: 4, kind: output, shape index: {1}]
  %5 = xla_tuple %s3, %s4
  %s6 = sld [smem:[#allocation0]]
  $region30: #{tpu_custom_call.1} parent=0
    _
  %s8 = ssub.s32 1, %s6
  %s9 = scalar_select 0, %s8, %s6
  $region1: #{tpu_custom_call.1} parent=0
    #allocation2 [shape = 'u8[65536]{0}', space=vmem, size = 0x10000, scoped, tag = 'output window, operand 0, single buffered']
    #allocation3 [shape = 's32[1]{0}', space=sflag, size = 0x4, scoped, tag = 'scoped memory for tpu_custom_call.1']
    #allocation4 [shape = 'u8[131072]{0}', space=vmem, size = 0x20000, scoped, tag = 'output window, operand 1, single buffered']
    #allocation5 [shape = 's32[1]{0}', space=sflag, size = 0x4, scoped, tag = 'scoped memory for tpu_custom_call.1']
    %10 = vsyncpa [#allocation3], 0
    %11 = vsyncpa [#allocation5], 0
    // Predicated region
    $region2: #{tpu_custom_call.1} parent=1 // pred_check
      _
    $region3: #{tpu_custom_call.1} parent=1 // pred_check_branch
      %13 = sbr.rel (0) target = $region5
    $region4: #{tpu_custom_call.1} parent=1 // pred_region
      _
    $region5: #{tpu_custom_call.1} parent=1 // pred_fallthru
      _
    // Predicated region
    $region6: #{tpu_custom_call.1} parent=1 // pred_check
      _
    $region7: #{tpu_custom_call.1} parent=1 // pred_check_branch
      %15 = sbr.rel (0) target = $region9
    $region8: #{tpu_custom_call.1} parent=1 // pred_region
      _
    $region9: #{tpu_custom_call.1} parent=1 // pred_fallthru
      _
    // Predicated region
    $region10: #{tpu_custom_call.1} parent=1 // pred_check
      _
    $region11: #{tpu_custom_call.1} parent=1 // pred_check_branch
      %17 = sbr.rel (0) target = $region13
    $region12: #{tpu_custom_call.1} parent=1 // pred_region
      _
    $region13: #{tpu_custom_call.1} parent=1 // pred_fallthru
      _
    %v18 = vld [vmem:[%s0] sm:$0xff]
    %v19 = vld [vmem:[%s0 + $0x8] sm:$0xff]
    %v20 = vld [vmem:[%s0 + $0x10] sm:$0xff]
    %v21 = vld [vmem:[%s0 + $0x18] sm:$0xff]
    %v22 = vld [vmem:[%s0 + $0x20] sm:$0xff]
    %v23 = vld [vmem:[%s0 + $0x28] sm:$0xff]
    %v24 = vld [vmem:[%s0 + $0x30] sm:$0xff]
    %v25 = vld [vmem:[%s0 + $0x38] sm:$0xff]
    %v26 = vld [vmem:[%s0 + $0x40] sm:$0xff]
    %v27 = vld [vmem:[%s0 + $0x48] sm:$0xff]
    %v28 = vld [vmem:[%s0 + $0x50] sm:$0xff]
    %v29 = vld [vmem:[%s0 + $0x58] sm:$0xff]
    %v30 = vld [vmem:[%s0 + $0x60] sm:$0xff]
    %v31 = vld [vmem:[%s0 + $0x68] sm:$0xff]
    %v32 = vld [vmem:[%s0 + $0x70] sm:$0xff]
    %v33 = vld [vmem:[%s0 + $0x78] sm:$0xff]
    %v34 = vld [vmem:[%s0 + $0x80] sm:$0xff]
    %v35 = vld [vmem:[%s0 + $0x88] sm:$0xff]
    %v36 = vld [vmem:[%s0 + $0x90] sm:$0xff]
    %v37 = vld [vmem:[%s0 + $0x98] sm:$0xff]
    %v38 = vld [vmem:[%s0 + $0xa0] sm:$0xff]
    %v39 = vld [vmem:[%s0 + $0xa8] sm:$0xff]
    %v40 = vld [vmem:[%s0 + $0xb0] sm:$0xff]
    %v41 = vld [vmem:[%s0 + $0xb8] sm:$0xff]
    %v42 = vld [vmem:[%s0 + $0xc0] sm:$0xff]
    %v43 = vld [vmem:[%s0 + $0xc8] sm:$0xff]
    %v44 = vld [vmem:[%s0 + $0xd0] sm:$0xff]
    %v45 = vld [vmem:[%s0 + $0xd8] sm:$0xff]
    %v46 = vld [vmem:[%s0 + $0xe0] sm:$0xff]
    %v47 = vld [vmem:[%s0 + $0xe8] sm:$0xff]
    %v48 = vld [vmem:[%s0 + $0xf0] sm:$0xff]
    %v49 = vld [vmem:[%s0 + $0xf8] sm:$0xff]
    %v50 = vld [vmem:[%s1] sm:$0xff]
    %v51 = vld [vmem:[%s1 + $0x8] sm:$0xff]
    %v52 = vld [vmem:[%s1 + $0x10] sm:$0xff]
    %v53 = vld [vmem:[%s1 + $0x18] sm:$0xff]
    %vm54 = vcmask 261120
    %v56 = vsel %vm54, %v18, 0
    %v59 = vsel %vm54, %v19, 0
    %v62 = vsel %vm54, %v20, 0
    %v65 = vsel %vm54, %v21, 0
    %v68 = vsel %vm54, %v22, 0
    %v71 = vsel %vm54, %v23, 0
    %v74 = vsel %vm54, %v24, 0
    %v77 = vsel %vm54, %v25, 0
    %v80 = vsel %vm54, %v26, 0
    %v83 = vsel %vm54, %v27, 0
    %v86 = vsel %vm54, %v28, 0
    %v89 = vsel %vm54, %v29, 0
    %v92 = vsel %vm54, %v30, 0
    %v95 = vsel %vm54, %v31, 0
    %v98 = vsel %vm54, %v32, 0
    %v101 = vsel %vm54, %v33, 0
    %v104 = vsel %vm54, %v34, 0
    %v107 = vsel %vm54, %v35, 0
    %v110 = vsel %vm54, %v36, 0
    %v113 = vsel %vm54, %v37, 0
    %v116 = vsel %vm54, %v38, 0
    %v119 = vsel %vm54, %v39, 0
    %v122 = vsel %vm54, %v40, 0
    %v125 = vsel %vm54, %v41, 0
    %v128 = vsel %vm54, %v42, 0
    %v131 = vsel %vm54, %v43, 0
    %v134 = vsel %vm54, %v44, 0
    %v137 = vsel %vm54, %v45, 0
    %v140 = vsel %vm54, %v46, 0
    %v143 = vsel %vm54, %v47, 0
    %v146 = vsel %vm54, %v48, 0
    %v149 = vsel %vm54, %v49, 0
    %151 = vmatpush.msra.mxu0 0.0
    %152 = vmatpush.msra.mxu0 0.0
    %153 = vmatpush.msra.mxu0 0.0
    %154 = vmatpush.msra.mxu0 0.0
    %155 = vmatpush.msra.mxu0 0.0
    %156 = vmatpush.msra.mxu0 0.0
    %157 = vmatpush.msra.mxu0 0.0
    %158 = vmatpush.msra.mxu0 0.0
    %159 = vmatpush.msra.mxu0 0.0
    %160 = vmatpush.msra.mxu0 0.0
    %161 = vmatpush.msra.mxu0 0.0
    %162 = vmatpush.msra.mxu0 0.0
    %163 = vmatpush.msra.mxu0 %v53
    %164 = vmatpush.msra.mxu0 %v52
    %165 = vmatpush.msra.mxu0 %v51
    %166 = vmatpush.msra.mxu0 %v50
    %167 = vmatmul.f32.gmra.mxu0 %v56
    %v168 = vpop.f32.mrf.mxu0
    %v169 = vadd.f32 0.0, %v168
    %170 = vmatmul.f32.gmra.mxu0 %v59
    %v171 = vpop.f32.mrf.mxu0
    %v172 = vadd.f32 0.0, %v171
    %173 = vmatmul.f32.gmra.mxu0 %v62
    %v174 = vpop.f32.mrf.mxu0
    %v175 = vadd.f32 0.0, %v174
    %176 = vmatmul.f32.gmra.mxu0 %v65
    %v177 = vpop.f32.mrf.mxu0
    %v178 = vadd.f32 0.0, %v177
    %179 = vmatmul.f32.gmra.mxu0 %v68
    %v180 = vpop.f32.mrf.mxu0
    %v181 = vadd.f32 0.0, %v180
    %182 = vmatmul.f32.gmra.mxu0 %v71
    %v183 = vpop.f32.mrf.mxu0
    %v184 = vadd.f32 0.0, %v183
    %185 = vmatmul.f32.gmra.mxu0 %v74
    %v186 = vpop.f32.mrf.mxu0
    %v187 = vadd.f32 0.0, %v186
    %188 = vmatmul.f32.gmra.mxu0 %v77
    %v189 = vpop.f32.mrf.mxu0
    %v190 = vadd.f32 0.0, %v189
    %191 = vmatmul.f32.gmra.mxu0 %v80
    %v192 = vpop.f32.mrf.mxu0
    %v193 = vadd.f32 0.0, %v192
    %194 = vmatmul.f32.gmra.mxu0 %v83
    %v195 = vpop.f32.mrf.mxu0
    %v196 = vadd.f32 0.0, %v195
    %197 = vmatmul.f32.gmra.mxu0 %v86
    %v198 = vpop.f32.mrf.mxu0
    %v199 = vadd.f32 0.0, %v198
    %200 = vmatmul.f32.gmra.mxu0 %v89
    %v201 = vpop.f32.mrf.mxu0
    %v202 = vadd.f32 0.0, %v201
    %203 = vmatmul.f32.gmra.mxu0 %v92
    %v204 = vpop.f32.mrf.mxu0
    %v205 = vadd.f32 0.0, %v204
    %206 = vmatmul.f32.gmra.mxu0 %v95
    %v207 = vpop.f32.mrf.mxu0
    %v208 = vadd.f32 0.0, %v207
    %209 = vmatmul.f32.gmra.mxu0 %v98
    %v210 = vpop.f32.mrf.mxu0
    %v211 = vadd.f32 0.0, %v210
    %212 = vmatmul.f32.gmra.mxu0 %v101
    %v213 = vpop.f32.mrf.mxu0
    %v214 = vadd.f32 0.0, %v213
    %215 = vmatmul.f32.gmra.mxu0 %v104
    %v216 = vpop.f32.mrf.mxu0
    %v217 = vadd.f32 0.0, %v216
    %218 = vmatmul.f32.gmra.mxu0 %v107
    %v219 = vpop.f32.mrf.mxu0
    %v220 = vadd.f32 0.0, %v219
    %221 = vmatmul.f32.gmra.mxu0 %v110
    %v222 = vpop.f32.mrf.mxu0
    %v223 = vadd.f32 0.0, %v222
    %224 = vmatmul.f32.gmra.mxu0 %v113
    %v225 = vpop.f32.mrf.mxu0
    %v226 = vadd.f32 0.0, %v225
    %227 = vmatmul.f32.gmra.mxu0 %v116
    %v228 = vpop.f32.mrf.mxu0
    %v229 = vadd.f32 0.0, %v228
    %230 = vmatmul.f32.gmra.mxu0 %v119
    %v231 = vpop.f32.mrf.mxu0
    %v232 = vadd.f32 0.0, %v231
    %233 = vmatmul.f32.gmra.mxu0 %v122
    %v234 = vpop.f32.mrf.mxu0
    %v235 = vadd.f32 0.0, %v234
    %236 = vmatmul.f32.gmra.mxu0 %v125
    %v237 = vpop.f32.mrf.mxu0
    %v238 = vadd.f32 0.0, %v237
    %239 = vmatmul.f32.gmra.mxu0 %v128
    %v240 = vpop.f32.mrf.mxu0
    %v241 = vadd.f32 0.0, %v240
    %242 = vmatmul.f32.gmra.mxu0 %v131
    %v243 = vpop.f32.mrf.mxu0
    %v244 = vadd.f32 0.0, %v243
    %245 = vmatmul.f32.gmra.mxu0 %v134
    %v246 = vpop.f32.mrf.mxu0
    %v247 = vadd.f32 0.0, %v246
    %248 = vmatmul.f32.gmra.mxu0 %v137
    %v249 = vpop.f32.mrf.mxu0
    %v250 = vadd.f32 0.0, %v249
    %251 = vmatmul.f32.gmra.mxu0 %v140
    %v252 = vpop.f32.mrf.mxu0
    %v253 = vadd.f32 0.0, %v252
    %254 = vmatmul.f32.gmra.mxu0 %v143
    %v255 = vpop.f32.mrf.mxu0
    %v256 = vadd.f32 0.0, %v255
    %257 = vmatmul.f32.gmra.mxu0 %v146
    %v258 = vpop.f32.mrf.mxu0
    %v259 = vadd.f32 0.0, %v258
    %260 = vmatmul.f32.gmra.mxu0 %v149
    %v261 = vpop.f32.mrf.mxu0
    %v262 = vadd.f32 0.0, %v261
    %263 = vdwg.mxu0
    %v264 = vpack.c.bf16 %v169, %v169
    %v265 = vpack.c.bf16 %v172, %v172
    %v266 = vpack.c.bf16 %v175, %v175
    %v267 = vpack.c.bf16 %v178, %v178
    %v268 = vpack.c.bf16 %v181, %v181
    %v269 = vpack.c.bf16 %v184, %v184
    %v270 = vpack.c.bf16 %v187, %v187
    %v271 = vpack.c.bf16 %v190, %v190
    %v272 = vpack.c.bf16 %v193, %v193
    %v273 = vpack.c.bf16 %v196, %v196
    %v274 = vpack.c.bf16 %v199, %v199
    %v275 = vpack.c.bf16 %v202, %v202
    %v276 = vpack.c.bf16 %v205, %v205
    %v277 = vpack.c.bf16 %v208, %v208
    %v278 = vpack.c.bf16 %v211, %v211
    %v279 = vpack.c.bf16 %v214, %v214
    %v280 = vpack.c.bf16 %v217, %v217
    %v281 = vpack.c.bf16 %v220, %v220
    %v282 = vpack.c.bf16 %v223, %v223
    %v283 = vpack.c.bf16 %v226, %v226
    %v284 = vpack.c.bf16 %v229, %v229
    %v285 = vpack.c.bf16 %v232, %v232
    %v286 = vpack.c.bf16 %v235, %v235
    %v287 = vpack.c.bf16 %v238, %v238
    %v288 = vpack.c.bf16 %v241, %v241
    %v289 = vpack.c.bf16 %v244, %v244
    %v290 = vpack.c.bf16 %v247, %v247
    %v291 = vpack.c.bf16 %v250, %v250
    %v292 = vpack.c.bf16 %v253, %v253
    %v293 = vpack.c.bf16 %v256, %v256
    %v294 = vpack.c.bf16 %v259, %v259
    %v295 = vpack.c.bf16 %v262, %v262
    %296 = vst [vmem:[#allocation2] sm:$0xf] %v264
    %297 = vst [vmem:[#allocation2 + $0x4] sm:$0xf] %v265
    %298 = vst [vmem:[#allocation2 + $0x8] sm:$0xf] %v266
    %299 = vst [vmem:[#allocation2 + $0xc] sm:$0xf] %v267
    %300 = vst [vmem:[#allocation2 + $0x10] sm:$0xf] %v268
    %301 = vst [vmem:[#allocation2 + $0x14] sm:$0xf] %v269
    %302 = vst [vmem:[#allocation2 + $0x18] sm:$0xf] %v270
    %303 = vst [vmem:[#allocation2 + $0x1c] sm:$0xf] %v271
    %304 = vst [vmem:[#allocation2 + $0x20] sm:$0xf] %v272
    %305 = vst [vmem:[#allocation2 + $0x24] sm:$0xf] %v273
    %306 = vst [vmem:[#allocation2 + $0x28] sm:$0xf] %v274
    %307 = vst [vmem:[#allocation2 + $0x2c] sm:$0xf] %v275
    %308 = vst [vmem:[#allocation2 + $0x30] sm:$0xf] %v276
    %309 = vst [vmem:[#allocation2 + $0x34] sm:$0xf] %v277
    %310 = vst [vmem:[#allocation2 + $0x38] sm:$0xf] %v278
    %311 = vst [vmem:[#allocation2 + $0x3c] sm:$0xf] %v279
    %312 = vst [vmem:[#allocation2 + $0x40] sm:$0xf] %v280
    %313 = vst [vmem:[#allocation2 + $0x44] sm:$0xf] %v281
    %314 = vst [vmem:[#allocation2 + $0x48] sm:$0xf] %v282
    %315 = vst [vmem:[#allocation2 + $0x4c] sm:$0xf] %v283
    %316 = vst [vmem:[#allocation2 + $0x50] sm:$0xf] %v284
    %317 = vst [vmem:[#allocation2 + $0x54] sm:$0xf] %v285
    %318 = vst [vmem:[#allocation2 + $0x58] sm:$0xf] %v286
    %319 = vst [vmem:[#allocation2 + $0x5c] sm:$0xf] %v287
    %320 = vst [vmem:[#allocation2 + $0x60] sm:$0xf] %v288
    %321 = vst [vmem:[#allocation2 + $0x64] sm:$0xf] %v289
    %322 = vst [vmem:[#allocation2 + $0x68] sm:$0xf] %v290
    %323 = vst [vmem:[#allocation2 + $0x6c] sm:$0xf] %v291
    %324 = vst [vmem:[#allocation2 + $0x70] sm:$0xf] %v292
    %325 = vst [vmem:[#allocation2 + $0x74] sm:$0xf] %v293
    %326 = vst [vmem:[#allocation2 + $0x78] sm:$0xf] %v294
    %327 = vst [vmem:[#allocation2 + $0x7c] sm:$0xf] %v295
    %v328 = vld [vmem:[%s2] sm:$0xff]
    %v329 = vld [vmem:[%s2 + $0x8] sm:$0xff]
    %v330 = vld [vmem:[%s2 + $0x10] sm:$0xff]
    %v331 = vld [vmem:[%s2 + $0x18] sm:$0xff]
    %v332 = vld [vmem:[%s2 + $0x20] sm:$0xff]
    %v333 = vld [vmem:[%s2 + $0x28] sm:$0xff]
    %v334 = vld [vmem:[%s2 + $0x30] sm:$0xff]
    %v335 = vld [vmem:[%s2 + $0x38] sm:$0xff]
    %v336 = vld [vmem:[%s2 + $0x40] sm:$0xff]
    %v337 = vld [vmem:[%s2 + $0x48] sm:$0xff]
    %v338 = vld [vmem:[%s2 + $0x50] sm:$0xff]
    %v339 = vld [vmem:[%s2 + $0x58] sm:$0xff]
    %v340 = vld [vmem:[%s2 + $0x60] sm:$0xff]
    %v341 = vld [vmem:[%s2 + $0x68] sm:$0xff]
    %v342 = vld [vmem:[%s2 + $0x70] sm:$0xff]
    %v343 = vld [vmem:[%s2 + $0x78] sm:$0xff]
    %344 = vmatpush.msra.mxu0 %v343
    %345 = vmatpush.msra.mxu0 %v342
    %346 = vmatpush.msra.mxu0 %v341
    %347 = vmatpush.msra.mxu0 %v340
    %348 = vmatpush.msra.mxu0 %v339
    %349 = vmatpush.msra.mxu0 %v338
    %350 = vmatpush.msra.mxu0 %v337
    %351 = vmatpush.msra.mxu0 %v336
    %352 = vmatpush.msra.mxu0 %v335
    %353 = vmatpush.msra.mxu0 %v334
    %354 = vmatpush.msra.mxu0 %v333
    %355 = vmatpush.msra.mxu0 %v332
    %356 = vmatpush.msra.mxu0 %v331
    %357 = vmatpush.msra.mxu0 %v330
    %358 = vmatpush.msra.mxu0 %v329
    %359 = vmatpush.msra.mxu0 %v328
    %360 = vmatmul.f32.gmra.mxu0 %v169
    %v361 = vpop.f32.mrf.mxu0
    %v362 = vadd.f32 0.0, %v361
    %363 = vmatmul.f32.gmra.mxu0 %v172
    %v364 = vpop.f32.mrf.mxu0
    %v365 = vadd.f32 0.0, %v364
    %366 = vmatmul.f32.gmra.mxu0 %v175
    %v367 = vpop.f32.mrf.mxu0
    %v368 = vadd.f32 0.0, %v367
    %369 = vmatmul.f32.gmra.mxu0 %v178
    %v370 = vpop.f32.mrf.mxu0
    %v371 = vadd.f32 0.0, %v370
    %372 = vmatmul.f32.gmra.mxu0 %v181
    %v373 = vpop.f32.mrf.mxu0
    %v374 = vadd.f32 0.0, %v373
    %375 = vmatmul.f32.gmra.mxu0 %v184
    %v376 = vpop.f32.mrf.mxu0
    %v377 = vadd.f32 0.0, %v376
    %378 = vmatmul.f32.gmra.mxu0 %v187
    %v379 = vpop.f32.mrf.mxu0
    %v380 = vadd.f32 0.0, %v379
    %381 = vmatmul.f32.gmra.mxu0 %v190
    %v382 = vpop.f32.mrf.mxu0
    %v383 = vadd.f32 0.0, %v382
    %384 = vmatmul.f32.gmra.mxu0 %v193
    %v385 = vpop.f32.mrf.mxu0
    %v386 = vadd.f32 0.0, %v385
    %387 = vmatmul.f32.gmra.mxu0 %v196
    %v388 = vpop.f32.mrf.mxu0
    %v389 = vadd.f32 0.0, %v388
    %390 = vmatmul.f32.gmra.mxu0 %v199
    %v391 = vpop.f32.mrf.mxu0
    %v392 = vadd.f32 0.0, %v391
    %393 = vmatmul.f32.gmra.mxu0 %v202
    %v394 = vpop.f32.mrf.mxu0
    %v395 = vadd.f32 0.0, %v394
    %396 = vmatmul.f32.gmra.mxu0 %v205
    %v397 = vpop.f32.mrf.mxu0
    %v398 = vadd.f32 0.0, %v397
    %399 = vmatmul.f32.gmra.mxu0 %v208
    %v400 = vpop.f32.mrf.mxu0
    %v401 = vadd.f32 0.0, %v400
    %402 = vmatmul.f32.gmra.mxu0 %v211
    %v403 = vpop.f32.mrf.mxu0
    %v404 = vadd.f32 0.0, %v403
    %405 = vmatmul.f32.gmra.mxu0 %v214
    %v406 = vpop.f32.mrf.mxu0
    %v407 = vadd.f32 0.0, %v406
    %408 = vmatmul.f32.gmra.mxu0 %v217
    %v409 = vpop.f32.mrf.mxu0
    %v410 = vadd.f32 0.0, %v409
    %411 = vmatmul.f32.gmra.mxu0 %v220
    %v412 = vpop.f32.mrf.mxu0
    %v413 = vadd.f32 0.0, %v412
    %414 = vmatmul.f32.gmra.mxu0 %v223
    %v415 = vpop.f32.mrf.mxu0
    %v416 = vadd.f32 0.0, %v415
    %417 = vmatmul.f32.gmra.mxu0 %v226
    %v418 = vpop.f32.mrf.mxu0
    %v419 = vadd.f32 0.0, %v418
    %420 = vmatmul.f32.gmra.mxu0 %v229
    %v421 = vpop.f32.mrf.mxu0
    %v422 = vadd.f32 0.0, %v421
    %423 = vmatmul.f32.gmra.mxu0 %v232
    %v424 = vpop.f32.mrf.mxu0
    %v425 = vadd.f32 0.0, %v424
    %426 = vmatmul.f32.gmra.mxu0 %v235
    %v427 = vpop.f32.mrf.mxu0
    %v428 = vadd.f32 0.0, %v427
    %429 = vmatmul.f32.gmra.mxu0 %v238
    %v430 = vpop.f32.mrf.mxu0
    %v431 = vadd.f32 0.0, %v430
    %432 = vmatmul.f32.gmra.mxu0 %v241
    %v433 = vpop.f32.mrf.mxu0
    %v434 = vadd.f32 0.0, %v433
    %435 = vmatmul.f32.gmra.mxu0 %v244
    %v436 = vpop.f32.mrf.mxu0
    %v437 = vadd.f32 0.0, %v436
    %438 = vmatmul.f32.gmra.mxu0 %v247
    %v439 = vpop.f32.mrf.mxu0
    %v440 = vadd.f32 0.0, %v439
    %441 = vmatmul.f32.gmra.mxu0 %v250
    %v442 = vpop.f32.mrf.mxu0
    %v443 = vadd.f32 0.0, %v442
    %444 = vmatmul.f32.gmra.mxu0 %v253
    %v445 = vpop.f32.mrf.mxu0
    %v446 = vadd.f32 0.0, %v445
    %447 = vmatmul.f32.gmra.mxu0 %v256
    %v448 = vpop.f32.mrf.mxu0
    %v449 = vadd.f32 0.0, %v448
    %450 = vmatmul.f32.gmra.mxu0 %v259
    %v451 = vpop.f32.mrf.mxu0
    %v452 = vadd.f32 0.0, %v451
    %453 = vmatmul.f32.gmra.mxu0 %v262
    %v454 = vpop.f32.mrf.mxu0
    %v455 = vadd.f32 0.0, %v454
    %456 = vdwg.mxu0
    %457 = vst [vmem:[#allocation4] sm:$0xff] %v362
    %458 = vst [vmem:[#allocation4 + $0x8] sm:$0xff] %v365
    %459 = vst [vmem:[#allocation4 + $0x10] sm:$0xff] %v368
    %460 = vst [vmem:[#allocation4 + $0x18] sm:$0xff] %v371
    %461 = vst [vmem:[#allocation4 + $0x20] sm:$0xff] %v374
    %462 = vst [vmem:[#allocation4 + $0x28] sm:$0xff] %v377
    %463 = vst [vmem:[#allocation4 + $0x30] sm:$0xff] %v380
    %464 = vst [vmem:[#allocation4 + $0x38] sm:$0xff] %v383
    %465 = vst [vmem:[#allocation4 + $0x40] sm:$0xff] %v386
    %466 = vst [vmem:[#allocation4 + $0x48] sm:$0xff] %v389
    %467 = vst [vmem:[#allocation4 + $0x50] sm:$0xff] %v392
    %468 = vst [vmem:[#allocation4 + $0x58] sm:$0xff] %v395
    %469 = vst [vmem:[#allocation4 + $0x60] sm:$0xff] %v398
    %470 = vst [vmem:[#allocation4 + $0x68] sm:$0xff] %v401
    %471 = vst [vmem:[#allocation4 + $0x70] sm:$0xff] %v404
    %472 = vst [vmem:[#allocation4 + $0x78] sm:$0xff] %v407
    %473 = vst [vmem:[#allocation4 + $0x80] sm:$0xff] %v410
    %474 = vst [vmem:[#allocation4 + $0x88] sm:$0xff] %v413
    %475 = vst [vmem:[#allocation4 + $0x90] sm:$0xff] %v416
    %476 = vst [vmem:[#allocation4 + $0x98] sm:$0xff] %v419
    %477 = vst [vmem:[#allocation4 + $0xa0] sm:$0xff] %v422
    %478 = vst [vmem:[#allocation4 + $0xa8] sm:$0xff] %v425
    %479 = vst [vmem:[#allocation4 + $0xb0] sm:$0xff] %v428
    %480 = vst [vmem:[#allocation4 + $0xb8] sm:$0xff] %v431
    %481 = vst [vmem:[#allocation4 + $0xc0] sm:$0xff] %v434
    %482 = vst [vmem:[#allocation4 + $0xc8] sm:$0xff] %v437
    %483 = vst [vmem:[#allocation4 + $0xd0] sm:$0xff] %v440
    %484 = vst [vmem:[#allocation4 + $0xd8] sm:$0xff] %v443
    %485 = vst [vmem:[#allocation4 + $0xe0] sm:$0xff] %v446
    %486 = vst [vmem:[#allocation4 + $0xe8] sm:$0xff] %v449
    %487 = vst [vmem:[#allocation4 + $0xf0] sm:$0xff] %v452
    %488 = vst [vmem:[#allocation4 + $0xf8] sm:$0xff] %v455
    // Predicated region
    $region14: #{tpu_custom_call.1} parent=1 // pred_check
      _
    $region15: #{tpu_custom_call.1} parent=1 // pred_check_branch
      %490 = sbr.rel (0) target = $region17
    $region16: #{tpu_custom_call.1} parent=1 // pred_region
      %492 = vsyncadd [#allocation3], 0
      %s493 = sshll.u32 [#allocation2], 4
      %s494 = int_to_ptr.vmem [resolvable:$true] %s493
      %s495 = sshll.u32 %s3, 4
      %s496 = int_to_ptr.hbm [resolvable:$true] %s495
      %501 = dma.vmem_to_hbm [thread:$0]  %s494, 2048, %s496, [#allocation3], 64, 64, 4
    $region17: #{tpu_custom_call.1} parent=1 // pred_fallthru
      _
    // Predicated region
    $region18: #{tpu_custom_call.1} parent=1 // pred_check
      _
    $region19: #{tpu_custom_call.1} parent=1 // pred_check_branch
      %503 = sbr.rel (0) target = $region21
    $region20: #{tpu_custom_call.1} parent=1 // pred_region
      %505 = vsyncadd [#allocation5], 0
      %s506 = sshll.u32 [#allocation4], 4
      %s507 = int_to_ptr.vmem [resolvable:$true] %s506
      %s508 = sshll.u32 %s4, 4
      %s509 = int_to_ptr.hbm [resolvable:$true] %s508
      %514 = dma.vmem_to_hbm [thread:$0]  %s507, 4096, %s509, [#allocation5], 128, 128, 8
    $region21: #{tpu_custom_call.1} parent=1 // pred_fallthru
      _
    // Predicated region
    $region22: #{tpu_custom_call.1} parent=1 // pred_check
      _
    $region23: #{tpu_custom_call.1} parent=1 // pred_check_branch
      %516 = sbr.rel (0) target = $region25
    $region24: #{tpu_custom_call.1} parent=1 // pred_region
      %518 = dma.done [#allocation3], 2048
    $region25: #{tpu_custom_call.1} parent=1 // pred_fallthru
      _
    // Predicated region
    $region26: #{tpu_custom_call.1} parent=1 // pred_check
      _
    $region27: #{tpu_custom_call.1} parent=1 // pred_check_branch
      %520 = sbr.rel (0) target = $region29
    $region28: #{tpu_custom_call.1} parent=1 // pred_region
      %522 = dma.done [#allocation5], 4096
    $region29: #{tpu_custom_call.1} parent=1 // pred_fallthru
      _
    %523 = vsyncpa [#allocation3], 1
    %524 = vsyncpa [#allocation5], 1

</llo_original>
